<compile_context>
chip_gen: v7x
topology: tpu7x:2x2x1
jax: 0.10.0
libtpu: 0.0.40
codegen_flags: <defaults>
</compile_context>

<pallas_src>
import math
from functools import partial

import jax
import jax.numpy as jnp
from jax.experimental import pallas as pl
from jax.experimental.pallas import tpu as pltpu


def _drop_path_kernel(x_ref, s_ref, o_ref):
    """out = x * scale, with the per-row scale broadcast across lanes.

    x_ref/o_ref: (tile_r, LANE) in the input dtype; s_ref: (tile_r, 1) f32
    holding 0.0 or 1/keep_prob. Multiply in the native dtype (single cast of
    the tiny scale column) to avoid the f32 round-trip on bf16 inputs.
    """
    o_ref[...] = x_ref[...] * s_ref[...].astype(x_ref.dtype)


@partial(jax.jit, static_argnames=("drop_prob",))
def _drop_path_impl(x, key, *, drop_prob):
    keep_prob = 1.0 - drop_prob
    B = x.shape[0]
    N = math.prod(x.shape[1:]) if x.ndim > 1 else 1
    dtype = x.dtype
    elt = jnp.dtype(dtype).itemsize

    # Per-sample scale: floor(keep_prob + U[0,1)) in {0,1}, times 1/keep_prob.
    u = jax.random.uniform(key, (B,), dtype=jnp.float32)
    random_tensor = jnp.floor(jnp.float32(keep_prob) + u)
    scale = random_tensor * jnp.float32(1.0 / keep_prob)  # (B,) f32

    # Lane width: a multiple of 128 that divides N (no pad / no slice).
    # Fall back to LANE=128 with a single pad+slice only when N % 128 != 0.
    if N % 128 == 0:
        lane = 128
        for k in range(8, 1, -1):  # prefer up to 1024 lanes
            if N % (128 * k) == 0:
                lane = 128 * k
                break
        n_pad = N
    else:
        lane = 128
        n_pad = ((N + 127) // 128) * 128

    M = n_pad // lane          # rows per sample
    R = B * M                  # total rows (blocks may span samples)

    x2 = x.reshape(B, N)
    if n_pad != N:
        x2 = jnp.pad(x2, ((0, 0), (0, n_pad - N)))
    x_rows = x2.reshape(R, lane)
    scale_rows = jnp.repeat(scale, M).reshape(R, 1)  # (R, 1) f32, per-row scale

    # Block sizing: ~4 MiB per x block; rows rounded to the sublane pack
    # factor (8 for 4-byte, 16 for 2-byte, 32 for 1-byte dtypes).
    pack = 8 * max(1, 4 // elt)
    target_rows = max(pack, ((4 * 1024 * 1024) // (lane * elt)) // pack * pack)
    tile_r = R if R <= target_rows else target_rows
    num_tiles = (R + tile_r - 1) // tile_r

    # v7x megacore: for 2-4 MiB tensors that would otherwise be a single
    # block, split into two tiles so both TensorCores get work (cheap on
    # single-core chips too, since each half is still >= 1 MiB).
    total_bytes = R * lane * elt
    if num_tiles == 1 and total_bytes >= (2 * 1024 * 1024) and R >= 2 * pack:
        half_rows = ((R + 1) // 2 + pack - 1) // pack * pack
        if half_rows < R:
            tile_r = half_rows
            num_tiles = (R + tile_r - 1) // tile_r

    out_rows = pl.pallas_call(
        _drop_path_kernel,
        out_shape=jax.ShapeDtypeStruct((R, lane), dtype),
        grid=(num_tiles,),
        in_specs=[
            pl.BlockSpec((tile_r, lane), lambda t: (t, 0)),
            pl.BlockSpec((tile_r, 1), lambda t: (t, 0)),
        ],
        out_specs=pl.BlockSpec((tile_r, lane), lambda t: (t, 0)),
        compiler_params=pltpu.CompilerParams(
            dimension_semantics=("parallel",),
            vmem_limit_bytes=48 * 1024 * 1024,
        ),
    )(x_rows, scale_rows)

    out = out_rows.reshape(B, n_pad)
    if n_pad != N:
        out = out[:, :N]
    return out.reshape(x.shape)


def drop_path(x, drop_prob: float = 0.0, training: bool = False, key=None):
    """Pallas implementation of timm's drop_path (stochastic depth)."""
    if drop_prob == 0.0 or not training:
        return x
    if drop_prob >= 1.0:
        # Guard the degenerate case (PyTorch's x.div(0) * 0 would be NaN).
        return jnp.zeros_like(x)
    if key is None:
        # Callers should pass a fresh key each step for real stochastic depth.
        key = jax.random.PRNGKey(0)
    return _drop_path_impl(x, key, drop_prob=float(drop_prob))


class DropPath:
    """Mirror of the PyTorch nn.Module (no parameters)."""

    def __init__(self, drop_prob=None):
        self.drop_prob = drop_prob
        self.training = True  # PyTorch modules default to training mode

    def __call__(self, x, key=None):
        p = self.drop_prob if self.drop_prob is not None else 0.0
        return drop_path(x, p, self.training, key)


def _check_samples(y, x, keep_prob, rtol, atol):
    """Each sample must be entirely zeroed or scaled by exactly 1/keep_prob."""
    x_f32 = x.astype(jnp.float32)
    for b in range(x.shape[0]):
        sample = y[b].astype(jnp.float32)
        is_zero = bool(jnp.all(sample == 0.0))
        is_scaled = bool(jnp.allclose(sample, x_f32[b] / keep_prob,
                                      rtol=rtol, atol=atol))
        assert is_zero or is_scaled, f"sample {b} has invalid DropPath output"


if __name__ == "__main__":
    root = jax.random.PRNGKey(0)
    kx, kd = jax.random.split(root)
    keep_prob = 0.75

    mod = DropPath(drop_prob=0.25)

    # Training mode, f32, N % 128 == 0 (no-pad fast path).
    x = jax.random.normal(kx, (2, 4, 16, 16), dtype=jnp.float32)
    y = jax.block_until_ready(mod(x, key=kd))
    assert y.shape == x.shape and y.dtype == x.dtype
    _check_samples(y, x, keep_prob, rtol=1e-5, atol=1e-5)

    # bf16 input: native-dtype multiply (looser tolerance from bf16 rounding).
    x_bf = x.astype(jnp.bfloat16)
    y_bf = jax.block_until_ready(mod(x_bf, key=kd))
    assert y_bf.dtype == jnp.bfloat16
    _check_samples(y_bf, x_bf, keep_prob, rtol=2e-2, atol=2e-2)

    # Odd per-sample size (N % 128 != 0) exercises the padded fallback path.
    x_odd = jax.random.normal(kx, (2, 3, 5, 7), dtype=jnp.float32)
    y_odd = jax.block_until_ready(mod(x_odd, key=kd))
    assert y_odd.shape == x_odd.shape
    _check_samples(y_odd, x_odd, keep_prob, rtol=1e-5, atol=1e-5)

    # Eval mode (and drop_prob=0) is the identity, matching the module.
    mod.training = False
    y_eval = jax.block_until_ready(mod(x))
    assert bool(jnp.array_equal(y_eval, x))

    print("KERNEL_OK")
</pallas_src>

<mosaic_0001>
module attributes {stable_mosaic.version = 11 : i64} {
  func.func @_drop_path_kernel(%arg0: i32, %arg1: memref<2x1024xf32, #tpu.memory_space<vmem>>, %arg2: memref<2x1xf32, #tpu.memory_space<vmem>>, %arg3: memref<2x1024xf32, #tpu.memory_space<vmem>>) attributes {dimension_semantics = [#tpu.dimension_semantics<parallel>], iteration_bounds = array<i64: 1>, scalar_prefetch = 0 : i64, scratch_operands = 0 : i64, tpu.core_type = #tpu.core_type<tc>, window_params = [{transform_indices = @transform_0, window_bounds = array<i64: 2, 1024>}, {transform_indices = @transform_1, window_bounds = array<i64: 2, 1>}, {transform_indices = @transform_2, window_bounds = array<i64: 2, 1024>}]} {
    %c0 = arith.constant 0 : index
    %c0_0 = arith.constant 0 : index
    %0 = vector.load %arg1[%c0, %c0_0] : memref<2x1024xf32, #tpu.memory_space<vmem>>, vector<2x1024xf32>
    %c0_1 = arith.constant 0 : index
    %c0_2 = arith.constant 0 : index
    %1 = vector.load %arg2[%c0_1, %c0_2] : memref<2x1xf32, #tpu.memory_space<vmem>>, vector<2x1xf32>
    %2 = vector.broadcast %1 : vector<2x1xf32> to vector<2x1024xf32>
    %3 = arith.mulf %0, %2 : vector<2x1024xf32>
    %c0_3 = arith.constant 0 : index
    %c0_4 = arith.constant 0 : index
    %4 = vector.load %arg3[%c0_3, %c0_4] : memref<2x1024xf32, #tpu.memory_space<vmem>>, vector<2x1024xf32>
    tpu.vector_store %arg3[%c0_3, %c0_4], %3 {strides = array<i32>} : memref<2x1024xf32, #tpu.memory_space<vmem>>, vector<2x1024xf32>,
    return
  }
  func.func @transform_0(%arg0: i32) -> (i32, i32) {
    %c0_i32 = arith.constant 0 : i32
    %c0_i32_0 = arith.constant 0 : i32
    return %arg0, %c0_i32 : i32, i32
  }
  func.func @transform_1(%arg0: i32) -> (i32, i32) {
    %c0_i32 = arith.constant 0 : i32
    %c0_i32_0 = arith.constant 0 : i32
    return %arg0, %c0_i32 : i32, i32
  }
  func.func @transform_2(%arg0: i32) -> (i32, i32) {
    %c0_i32 = arith.constant 0 : i32
    %c0_i32_0 = arith.constant 0 : i32
    return %arg0, %c0_i32 : i32, i32
  }
}

</mosaic_0001>

<llo_original>
// kernel: _drop_path_impl.1
$region0: #{_drop_path_impl.1}
  #allocation0 [shape = 'u32[]', space=smem, size = 0x4, offset = 0x4, fixed_abs, tag = 'smem constant byte address 0x4 - core index']
  #allocation1 [shape = 'u32[144,128]{1,0:T(1,128)}', space=vmem, size = 0x12000, scoped, tag = 'internal scratch']
  %s0 = inlined_call_operand.vmem [shape: f32[2,1024], index: 0, kind: input, shape index: {}]
  %s1 = inlined_call_operand.vmem [shape: f32[2,1], index: 1, kind: input, shape index: {}]
  %s2 = inlined_call_operand.vmem [shape: f32[2,1024], index: 2, kind: output, shape index: {}]
  %s3 = sld [smem:[#allocation0]]
  $region18: #{_drop_path_impl.1} parent=0
    _
  %s5 = ssub.s32 1, %s3
  %s6 = scalar_select 0, %s5, %s3
  // Predicated region
  $region2: #{_drop_path_impl.1} parent=0 // pred_check
    _
  $region3: #{_drop_path_impl.1} parent=0 // pred_check_branch
    %8 = sbr.rel (0) target = $region5
  $region4: #{_drop_path_impl.1} parent=0 // pred_region
    _
  $region5: #{_drop_path_impl.1} parent=0 // pred_fallthru
    _
  // Predicated region
  $region6: #{_drop_path_impl.1} parent=0 // pred_check
    _
  $region7: #{_drop_path_impl.1} parent=0 // pred_check_branch
    %10 = sbr.rel (0) target = $region9
  $region8: #{_drop_path_impl.1} parent=0 // pred_region
    _
  $region9: #{_drop_path_impl.1} parent=0 // pred_fallthru
    _
  %v11 = vld [vmem:[%s0] sm:$0xff]
  %v12 = vld [vmem:[%s0 + $0x8] sm:$0xff]
  %v13 = vld [vmem:[%s1] sm:$0x3]
  %15 = vset.pattern.permute.xlu0 0
  %16 = vperm.xlu0 %15, %v13
  %v17 = vpop.permute.xlu0 %16
  %v19 = vunpack.c.l.s4 269488144
  %v20 = vunpack.c.0.s8 %v19
  %v21 = vlaneseq
  %v22 = vshrl.u32 %v21, 7
  %v23 = vsub.s32 %v20, %v22
  %v24 = vrot.slane %v17, %v23
  %v26 = vmul.f32 %v11, %v24
  %v27 = vmul.f32 %v12, %v24
  %28 = vst [vmem:[%s2] sm:$0xff] %v26
  %29 = vst [vmem:[%s2 + $0x8] sm:$0xff] %v27
  // Predicated region
  $region10: #{_drop_path_impl.1} parent=0 // pred_check
    _
  $region11: #{_drop_path_impl.1} parent=0 // pred_check_branch
    %31 = sbr.rel (0) target = $region13
  $region12: #{_drop_path_impl.1} parent=0 // pred_region
    _
  $region13: #{_drop_path_impl.1} parent=0 // pred_fallthru
    _
  // Predicated region
  $region14: #{_drop_path_impl.1} parent=0 // pred_check
    _
  $region15: #{_drop_path_impl.1} parent=0 // pred_check_branch
    %33 = sbr.rel (0) target = $region17
  $region16: #{_drop_path_impl.1} parent=0 // pred_region
    _
  $region17: #{_drop_path_impl.1} parent=0 // pred_fallthru
    _

</llo_original>
